<compile_context>
chip_gen: v7x
topology: tpu7x:2x2x1
jax: 0.10.0
libtpu: 0.0.40
codegen_flags: <defaults>
</compile_context>

<pallas_src>
import functools

import jax
import jax.numpy as jnp
from jax.experimental import pallas as pl
from jax.experimental.pallas import tpu as pltpu

# Sized so double-buffered tiles + accumulator fit v7x's 64 MiB VMEM with headroom.
_VMEM_LIMIT_BYTES = 48 * 1024 * 1024


def _round_up(x, m):
    return ((x + m - 1) // m) * m


def _pad2d(x, rows, cols):
    pr, pc = rows - x.shape[0], cols - x.shape[1]
    if pr or pc:
        x = jnp.pad(x, ((0, pr), (0, pc)))
    return x


# ----------------------------------------------------------------------------
# Kernel 1: fused projection  Z = H_src @ [W_neigh | W_self]
# ----------------------------------------------------------------------------
def project_kernel(h_ref, w_ref, z_ref):
    h = h_ref[...].astype(jnp.bfloat16)           # (tk, D_in_p)
    w = w_ref[...].astype(jnp.bfloat16)           # (D_in_p, 2*D_out_p)
    z = jnp.dot(h, w, preferred_element_type=jnp.float32)
    z_ref[...] = z.astype(z_ref.dtype)


# ----------------------------------------------------------------------------
# Kernel 2: tiled mean-aggregation + epilogue
#   grid = (N_dst_p / tm, N_src_p / tk); k is the reduction axis.
# ----------------------------------------------------------------------------
def aggregate_kernel(a_ref, zn_ref, zs_ref, b_ref, o_ref, acc_ref, *, apply_relu):
    k = pl.program_id(1)

    @pl.when(k == 0)
    def _():
        acc_ref[...] = jnp.zeros_like(acc_ref)

    a = a_ref[...].astype(jnp.bfloat16)           # (tm, tk)  row-normalized adj tile
    zn = zn_ref[...].astype(jnp.bfloat16)         # (tk, D_out_p)  neighbor projection
    acc_ref[...] += jnp.dot(a, zn, preferred_element_type=jnp.float32)

    @pl.when(k == pl.num_programs(1) - 1)
    def _():
        out = acc_ref[...] + zs_ref[...].astype(jnp.float32) + b_ref[...]
        if apply_relu:
            out = jnp.maximum(out, 0.0)
        o_ref[...] = out.astype(o_ref.dtype)


# ----------------------------------------------------------------------------
# One SAGEConv('mean') layer
# ----------------------------------------------------------------------------
def sage_layer(a_norm, h, w_self, w_neigh, bias, *, apply_relu, tm=128, tk=512):
    n_dst, n_src = a_norm.shape
    d_in = h.shape[1]
    d_out = w_self.shape[1]
    assert h.shape[0] == n_src and w_neigh.shape == (d_in, d_out)

    # Lane-dense padded feature dims (multiples of 128).
    d_in_p = _round_up(d_in, 128)
    d_out_p = _round_up(d_out, 128)

    # Tile sizes clamped to the (padded) problem, respecting the (8,128) rule.
    tm = min(tm, _round_up(n_dst, 8))
    tk = min(tk, _round_up(n_src, 128))
    n_dst_p = _round_up(n_dst, tm)
    n_src_p = _round_up(max(n_src, n_dst_p), tk)

    # Zero-padded operands (zero padding leaves the math unchanged).
    a_p = _pad2d(a_norm, n_dst_p, n_src_p)                       # (N_dst_p, N_src_p)
    h_p = _pad2d(h, n_src_p, d_in_p)                             # (N_src_p, D_in_p)

    # Stacked weights: columns [0:D_out_p) -> W_neigh, [D_out_p:2*D_out_p) -> W_self.
    w_cat = jnp.zeros((d_in_p, 2 * d_out_p), jnp.bfloat16)
    w_cat = w_cat.at[:d_in, :d_out].set(w_neigh.astype(jnp.bfloat16))
    w_cat = w_cat.at[:d_in, d_out_p:d_out_p + d_out].set(w_self.astype(jnp.bfloat16))
    b_p = jnp.zeros((1, d_out_p), jnp.float32).at[0, :d_out].set(bias)

    cparams_proj = pltpu.CompilerParams(
        dimension_semantics=("parallel",),
        vmem_limit_bytes=_VMEM_LIMIT_BYTES)
    cparams_agg = pltpu.CompilerParams(
        dimension_semantics=("parallel", "arbitrary"),
        vmem_limit_bytes=_VMEM_LIMIT_BYTES)

    # --- projection: Z = H_src @ [W_neigh | W_self]  (hoisted, paid once) ---
    z = pl.pallas_call(
        project_kernel,
        out_shape=jax.ShapeDtypeStruct((n_src_p, 2 * d_out_p), jnp.bfloat16),
        grid_spec=pltpu.PrefetchScalarGridSpec(
            num_scalar_prefetch=0,
            grid=(n_src_p // tk,),
            in_specs=[
                pl.BlockSpec((tk, d_in_p), lambda s: (s, 0)),
                pl.BlockSpec((d_in_p, 2 * d_out_p), lambda s: (0, 0)),
            ],
            out_specs=pl.BlockSpec((tk, 2 * d_out_p), lambda s: (s, 0)),
        ),
        compiler_params=cparams_proj,
    )(h_p, w_cat)

    # --- aggregation: out = relu(A @ Z_neigh + Z_self + bias) ---
    kernel = functools.partial(aggregate_kernel, apply_relu=apply_relu)
    out_p = pl.pallas_call(
        kernel,
        out_shape=jax.ShapeDtypeStruct((n_dst_p, d_out_p), jnp.float32),
        grid_spec=pltpu.PrefetchScalarGridSpec(
            num_scalar_prefetch=0,
            grid=(n_dst_p // tm, n_src_p // tk),
            in_specs=[
                pl.BlockSpec((tm, tk), lambda i, k: (i, k)),        # A tile
                pl.BlockSpec((tk, d_out_p), lambda i, k: (k, 0)),   # Z neigh half
                pl.BlockSpec((tm, d_out_p), lambda i, k: (i, 1)),   # Z self half (dst rows)
                pl.BlockSpec((1, d_out_p), lambda i, k: (0, 0)),    # bias
            ],
            out_specs=pl.BlockSpec((tm, d_out_p), lambda i, k: (i, 0)),
            scratch_shapes=[pltpu.VMEM((tm, d_out_p), jnp.float32)],
        ),
        compiler_params=cparams_agg,
    )(a_p, z, z, b_p)

    return out_p[:n_dst, :d_out]


def sage_forward(blocks, x, params):
    """Mirrors SAGE.forward: loop over (layer, block) pairs."""
    h = x
    n_layers = len(params)
    for i, (a_norm, p) in enumerate(zip(blocks, params)):
        h = sage_layer(a_norm, h, p["w_self"], p["w_neigh"], p["bias"],
                       apply_relu=(i != n_layers - 1))
        # dropout: identity in eval mode
    return h


# ----------------------------------------------------------------------------
# Demo data
# ----------------------------------------------------------------------------
def make_block(key, n_dst, n_src, p_edge=0.3):
    """Dense row-normalized adjacency for a bipartite block (mean aggregation).

    Stored in bf16 (row-normalized probabilities) to halve the dominant HBM stream.
    """
    adj = (jax.random.uniform(key, (n_dst, n_src)) < p_edge).astype(jnp.float32)
    idx = jnp.arange(n_dst)
    adj = adj.at[idx, idx].set(1.0)           # guarantee degree >= 1 (self edge)
    deg = adj.sum(axis=1, keepdims=True)
    return (adj / deg).astype(jnp.bfloat16)


def init_params(key, in_feats, n_hidden, n_classes, n_layers):
    params = []
    for i in range(n_layers):
        d_in = in_feats if i == 0 else n_hidden
        d_out = n_classes if i == n_layers - 1 else n_hidden
        key, k1, k2 = jax.random.split(key, 3)
        scale = 1.0 / jnp.sqrt(jnp.float32(d_in))
        params.append({
            "w_self": jax.random.normal(k1, (d_in, d_out), jnp.float32) * scale,
            "w_neigh": jax.random.normal(k2, (d_in, d_out), jnp.float32) * scale,
            "bias": jnp.zeros((d_out,), jnp.float32),
        })
    return params


if __name__ == "__main__":
    in_feats, n_hidden, n_classes, n_layers = 16, 32, 8, 2
    n_src0, n_dst0, n_dst1 = 64, 32, 16   # node counts per block

    root = jax.random.PRNGKey(0)
    k_feat, k_b0, k_b1, k_par = jax.random.split(root, 4)

    x = jax.random.normal(k_feat, (n_src0, in_feats), jnp.float32)
    blocks = [
        make_block(k_b0, n_dst0, n_src0),   # layer 0: 64 src -> 32 dst
        make_block(k_b1, n_dst1, n_dst0),   # layer 1: 32 src -> 16 dst
    ]
    params = init_params(k_par, in_feats, n_hidden, n_classes, n_layers)

    out = sage_forward(blocks, x, params)
    out = jax.block_until_ready(out)

    # pure-JAX f32 reference (kernel uses bf16 operands + f32 accumulation,
    # so compare with a bf16-level tolerance)
    h_ref = x
    for i, (a, p) in enumerate(zip(blocks, params)):
        a32 = a.astype(jnp.float32)
        neigh = a32 @ h_ref
        h_ref = (h_ref[: a.shape[0]] @ p["w_self"]
                 + neigh @ p["w_neigh"] + p["bias"])
        if i != n_layers - 1:
            h_ref = jnp.maximum(h_ref, 0.0)

    assert out.shape == (n_dst1, n_classes)
    assert jnp.allclose(out, h_ref, atol=5e-2, rtol=5e-2), (
        float(jnp.max(jnp.abs(out - h_ref))))

    print("KERNEL_OK")
</pallas_src>

<mosaic_0001>
module attributes {stable_mosaic.version = 11 : i64} {
  func.func @project_kernel(%arg0: i32, %arg1: memref<128x128xf32, #tpu.memory_space<vmem>>, %arg2: memref<128x256xbf16, #tpu.memory_space<vmem>>, %arg3: memref<128x256xbf16, #tpu.memory_space<vmem>>) attributes {dimension_semantics = [#tpu.dimension_semantics<parallel>], iteration_bounds = array<i64: 1>, scalar_prefetch = 0 : i64, scratch_operands = 0 : i64, tpu.core_type = #tpu.core_type<tc>, window_params = [{transform_indices = @transform_0, window_bounds = array<i64: 128, 128>}, {pipeline_mode = #tpu.pipeline_mode<synchronous>, transform_indices = @transform_1, window_bounds = array<i64: 128, 256>}, {transform_indices = @transform_2, window_bounds = array<i64: 128, 256>}]} {
    %c0 = arith.constant 0 : index
    %c0_0 = arith.constant 0 : index
    %0 = vector.load %arg1[%c0, %c0_0] : memref<128x128xf32, #tpu.memory_space<vmem>>, vector<128x128xf32>
    %1 = arith.truncf %0 : vector<128x128xf32> to vector<128x128xbf16>
    %c0_1 = arith.constant 0 : index
    %c0_2 = arith.constant 0 : index
    %2 = vector.load %arg2[%c0_1, %c0_2] : memref<128x256xbf16, #tpu.memory_space<vmem>>, vector<128x256xbf16>
    %cst = arith.constant dense<0.000000e+00> : vector<128x256xf32>
    %3 = tpu.matmul %1, %2, %cst {dimension_numbers = #tpu.dot_dimension_numbers<[1], [0], [0], [1], [0, 0, 1, 1], [], []>} : vector<128x128xbf16>, vector<128x256xbf16>, vector<128x256xf32> -> vector<128x256xf32>
    %4 = arith.truncf %3 : vector<128x256xf32> to vector<128x256xbf16>
    %c0_3 = arith.constant 0 : index
    %c0_4 = arith.constant 0 : index
    %5 = vector.load %arg3[%c0_3, %c0_4] : memref<128x256xbf16, #tpu.memory_space<vmem>>, vector<128x256xbf16>
    tpu.vector_store %arg3[%c0_3, %c0_4], %4 {strides = array<i32>} : memref<128x256xbf16, #tpu.memory_space<vmem>>, vector<128x256xbf16>,
    return
  }
  func.func @transform_0(%arg0: i32) -> (i32, i32) {
    %c0_i32 = arith.constant 0 : i32
    %c0_i32_0 = arith.constant 0 : i32
    return %arg0, %c0_i32 : i32, i32
  }
  func.func @transform_1(%arg0: i32) -> (i32, i32) {
    %c0_i32 = arith.constant 0 : i32
    %c0_i32_0 = arith.constant 0 : i32
    %c0_i32_1 = arith.constant 0 : i32
    return %c0_i32, %c0_i32_0 : i32, i32
  }
  func.func @transform_2(%arg0: i32) -> (i32, i32) {
    %c0_i32 = arith.constant 0 : i32
    %c0_i32_0 = arith.constant 0 : i32
    return %arg0, %c0_i32 : i32, i32
  }
}

</mosaic_0001>

<llo_original>
// kernel: tpu_custom_call.1
$region0: #{tpu_custom_call.1}
  #allocation0 [shape = 'u32[]', space=smem, size = 0x4, offset = 0x4, fixed_abs, tag = 'smem constant byte address 0x4 - core index']
  #allocation1 [shape = 'u32[144,128]{1,0:T(1,128)}', space=vmem, size = 0x12000, scoped, tag = 'internal scratch']
  %s0 = inlined_call_operand.hbm [shape: f32[128,128], index: 0, kind: input, shape index: {}]
  %s1 = inlined_call_operand.hbm [shape: bf16[128,256], index: 1, kind: input, shape index: {}]
  %s2 = inlined_call_operand.hbm [shape: bf16[128,256], index: 2, kind: output, shape index: {}]
  %s3 = sld [smem:[#allocation0]]
  $region26: #{tpu_custom_call.1} parent=0
    _
  %s5 = ssub.s32 1, %s3
  %s6 = scalar_select 0, %s5, %s3
  $region1: #{tpu_custom_call.1} parent=0
    #allocation2 [shape = 'u8[65536]{0}', space=vmem, size = 0x10000, scoped, tag = 'input window, operand 0, single buffered']
    #allocation3 [shape = 's32[1]{0}', space=sflag, size = 0x4, scoped, tag = 'scoped memory for tpu_custom_call.1']
    #allocation4 [shape = 's32[1]{0}', space=sflag, size = 0x4, scoped, tag = 'scoped memory for tpu_custom_call.1']
    #allocation5 [shape = 'u8[65536]{0}', space=vmem, size = 0x10000, scoped, tag = 'input window, operand 1, single buffered']
    #allocation6 [shape = 's32[1]{0}', space=sflag, size = 0x4, scoped, tag = 'scoped memory for tpu_custom_call.1']
    #allocation7 [shape = 'u8[65536]{0}', space=vmem, size = 0x10000, scoped, tag = 'output window, operand 0, single buffered']
    %7 = vsyncpa [#allocation3], 0
    %8 = vsyncpa [#allocation6], 0
    %9 = vsyncpa [#allocation4], 0
    // Predicated region
    $region2: #{tpu_custom_call.1} parent=1 // pred_check
      _
    $region3: #{tpu_custom_call.1} parent=1 // pred_check_branch
      %11 = sbr.rel (0) target = $region5
    $region4: #{tpu_custom_call.1} parent=1 // pred_region
      %s13 = ssub.s32 2048, 2048
      %14 = vsyncadd [#allocation3], %s13
      %s15 = sshll.u32 [#allocation2], 4
      %s16 = int_to_ptr.vmem [resolvable:$true] %s15
      %21 = dma.hbm_to_vmem [thread:$0]  %s0, 2048, %s16, [#allocation3], 128, 128, 8
    $region5: #{tpu_custom_call.1} parent=1 // pred_fallthru
      _
    // Predicated region
    $region6: #{tpu_custom_call.1} parent=1 // pred_check
      _
    $region7: #{tpu_custom_call.1} parent=1 // pred_check_branch
      %23 = sbr.rel (0) target = $region9
    $region8: #{tpu_custom_call.1} parent=1 // pred_region
      %s25 = ssub.s32 2048, 2048
      %26 = vsyncadd [#allocation6], %s25
      %s27 = sshll.u32 [#allocation5], 4
      %s28 = int_to_ptr.vmem [resolvable:$true] %s27
      %33 = dma.hbm_to_vmem [thread:$0]  %s1, 2048, %s28, [#allocation6], 128, 128, 8
    $region9: #{tpu_custom_call.1} parent=1 // pred_fallthru
      _
    // Predicated region
    $region10: #{tpu_custom_call.1} parent=1 // pred_check
      _
    $region11: #{tpu_custom_call.1} parent=1 // pred_check_branch
      %35 = sbr.rel (0) target = $region13
    $region12: #{tpu_custom_call.1} parent=1 // pred_region
      %36 = dma.done [#allocation3], 2048
    $region13: #{tpu_custom_call.1} parent=1 // pred_fallthru
      _
    // Predicated region
    $region14: #{tpu_custom_call.1} parent=1 // pred_check
      _
    $region15: #{tpu_custom_call.1} parent=1 // pred_check_branch
      %38 = sbr.rel (0) target = $region17
    $region16: #{tpu_custom_call.1} parent=1 // pred_region
      %39 = dma.done [#allocation6], 2048
    $region17: #{tpu_custom_call.1} parent=1 // pred_fallthru
      _
    %v41 = vld [vmem:[#allocation2] sm:$0xff]
    %v42 = vld [vmem:[#allocation2 + $0x8] sm:$0xff]
    %v43 = vld [vmem:[#allocation2 + $0x10] sm:$0xff]
    %v44 = vld [vmem:[#allocation2 + $0x18] sm:$0xff]
    %v45 = vld [vmem:[#allocation2 + $0x20] sm:$0xff]
    %v46 = vld [vmem:[#allocation2 + $0x28] sm:$0xff]
    %v47 = vld [vmem:[#allocation2 + $0x30] sm:$0xff]
    %v48 = vld [vmem:[#allocation2 + $0x38] sm:$0xff]
    %v49 = vld [vmem:[#allocation2 + $0x40] sm:$0xff]
    %v50 = vld [vmem:[#allocation2 + $0x48] sm:$0xff]
    %v51 = vld [vmem:[#allocation2 + $0x50] sm:$0xff]
    %v52 = vld [vmem:[#allocation2 + $0x58] sm:$0xff]
    %v53 = vld [vmem:[#allocation2 + $0x60] sm:$0xff]
    %v54 = vld [vmem:[#allocation2 + $0x68] sm:$0xff]
    %v55 = vld [vmem:[#allocation2 + $0x70] sm:$0xff]
    %v56 = vld [vmem:[#allocation2 + $0x78] sm:$0xff]
    %v57 = vpack.c.bf16 %v42, %v41
    %v58 = vpack.c.bf16 %v44, %v43
    %v59 = vpack.c.bf16 %v46, %v45
    %v60 = vpack.c.bf16 %v48, %v47
    %v61 = vpack.c.bf16 %v50, %v49
    %v62 = vpack.c.bf16 %v52, %v51
    %v63 = vpack.c.bf16 %v54, %v53
    %v64 = vpack.c.bf16 %v56, %v55
    %v65 = vld [vmem:[#allocation5] sm:$0xff]
    %v66 = vld [vmem:[#allocation5 + $0x8] sm:$0xff]
    %v67 = vld [vmem:[#allocation5 + $0x10] sm:$0xff]
    %v68 = vld [vmem:[#allocation5 + $0x18] sm:$0xff]
    %v69 = vld [vmem:[#allocation5 + $0x20] sm:$0xff]
    %v70 = vld [vmem:[#allocation5 + $0x28] sm:$0xff]
    %v71 = vld [vmem:[#allocation5 + $0x30] sm:$0xff]
    %v72 = vld [vmem:[#allocation5 + $0x38] sm:$0xff]
    %v73 = vld [vmem:[#allocation5 + $0x40] sm:$0xff]
    %v74 = vld [vmem:[#allocation5 + $0x48] sm:$0xff]
    %v75 = vld [vmem:[#allocation5 + $0x50] sm:$0xff]
    %v76 = vld [vmem:[#allocation5 + $0x58] sm:$0xff]
    %v77 = vld [vmem:[#allocation5 + $0x60] sm:$0xff]
    %v78 = vld [vmem:[#allocation5 + $0x68] sm:$0xff]
    %v79 = vld [vmem:[#allocation5 + $0x70] sm:$0xff]
    %v80 = vld [vmem:[#allocation5 + $0x78] sm:$0xff]
    %v97 = vunpack.c.l.b16 %v65
    %v98 = vunpack.c.h.b16 %v65
    %v99 = vunpack.c.l.b16 %v66
    %v100 = vunpack.c.h.b16 %v66
    %v101 = vunpack.c.l.b16 %v67
    %v102 = vunpack.c.h.b16 %v67
    %v103 = vunpack.c.l.b16 %v68
    %v104 = vunpack.c.h.b16 %v68
    %v105 = vunpack.c.l.b16 %v69
    %v106 = vunpack.c.h.b16 %v69
    %v107 = vunpack.c.l.b16 %v70
    %v108 = vunpack.c.h.b16 %v70
    %v109 = vunpack.c.l.b16 %v71
    %v110 = vunpack.c.h.b16 %v71
    %v111 = vunpack.c.l.b16 %v72
    %v112 = vunpack.c.h.b16 %v72
    %v113 = vunpack.c.l.b16 %v73
    %v114 = vunpack.c.h.b16 %v73
    %v115 = vunpack.c.l.b16 %v74
    %v116 = vunpack.c.h.b16 %v74
    %v117 = vunpack.c.l.b16 %v75
    %v118 = vunpack.c.h.b16 %v75
    %v119 = vunpack.c.l.b16 %v76
    %v120 = vunpack.c.h.b16 %v76
    %v121 = vunpack.c.l.b16 %v77
    %v122 = vunpack.c.h.b16 %v77
    %v123 = vunpack.c.l.b16 %v78
    %v124 = vunpack.c.h.b16 %v78
    %v125 = vunpack.c.l.b16 %v79
    %v126 = vunpack.c.h.b16 %v79
    %v127 = vunpack.c.l.b16 %v80
    %v128 = vunpack.c.h.b16 %v80
    %v129 = vpack.c.b16 %v99, %v97
    %v130 = vpack.c.b16 %v100, %v98
    %v131 = vpack.c.b16 %v103, %v101
    %v132 = vpack.c.b16 %v104, %v102
    %v133 = vpack.c.b16 %v107, %v105
    %v134 = vpack.c.b16 %v108, %v106
    %v135 = vpack.c.b16 %v111, %v109
    %v136 = vpack.c.b16 %v112, %v110
    %v137 = vpack.c.b16 %v115, %v113
    %v138 = vpack.c.b16 %v116, %v114
    %v139 = vpack.c.b16 %v119, %v117
    %v140 = vpack.c.b16 %v120, %v118
    %v141 = vpack.c.b16 %v123, %v121
    %v142 = vpack.c.b16 %v124, %v122
    %v143 = vpack.c.b16 %v127, %v125
    %v144 = vpack.c.b16 %v128, %v126
    %161 = vmatprep.subr.bf16.mxu0 %v130
    %162 = vmatpush1.bf16.msra.mxu0 %v129
    %163 = vmatprep.subr.bf16.mxu0 %v132
    %164 = vmatpush1.bf16.msra.mxu0 %v131
    %165 = vmatprep.subr.bf16.mxu0 %v134
    %166 = vmatpush1.bf16.msra.mxu0 %v133
    %167 = vmatprep.subr.bf16.mxu0 %v136
    %168 = vmatpush1.bf16.msra.mxu0 %v135
    %169 = vmatprep.subr.bf16.mxu0 %v138
    %170 = vmatpush1.bf16.msra.mxu0 %v137
    %171 = vmatprep.subr.bf16.mxu0 %v140
    %172 = vmatpush1.bf16.msra.mxu0 %v139
    %173 = vmatprep.subr.bf16.mxu0 %v142
    %174 = vmatpush1.bf16.msra.mxu0 %v141
    %175 = vmatprep.subr.bf16.mxu0 %v144
    %176 = vmatpush1.bf16.msra.mxu0 %v143
    %177 = vmatprep.subr.bf16.mxu0 0
    %178 = vmatpush1.bf16.msra.mxu0 0
    %179 = vmatprep.subr.bf16.mxu0 0
    %180 = vmatpush1.bf16.msra.mxu0 0
    %181 = vmatprep.subr.bf16.mxu0 0
    %182 = vmatpush1.bf16.msra.mxu0 0
    %183 = vmatprep.subr.bf16.mxu0 0
    %184 = vmatpush1.bf16.msra.mxu0 0
    %185 = vmatprep.subr.bf16.mxu0 0
    %186 = vmatpush1.bf16.msra.mxu0 0
    %187 = vmatprep.subr.bf16.mxu0 0
    %188 = vmatpush1.bf16.msra.mxu0 0
    %189 = vmatprep.subr.bf16.mxu0 0
    %190 = vmatpush1.bf16.msra.mxu0 0
    %191 = vmatprep.subr.bf16.mxu0 0
    %192 = vmatpush1.bf16.msra.mxu0 0
    %193 = vmatprep.mubr.bf16.mxu0 0
    %194 = vmatmul.mubr.bf16.gmra.mrb[0].mxu0 %v57
    %v195 = vpop.f32.mrb[0].mxu0
    %v196 = vadd.f32 0.0, %v195
    %v197 = vpop.f32.mrb[0].mxu0
    %v198 = vadd.f32 0.0, %v197
    %v199 = vpop.f32.mrb[0].mxu0
    %v200 = vadd.f32 0.0, %v199
    %v201 = vpop.f32.mrb[0].mxu0
    %v202 = vadd.f32 0.0, %v201
    %203 = vmatprep.mubr.bf16.mxu0 0
    %204 = vmatmul.mubr.bf16.gmra.mrb[0].mxu0 %v58
    %v205 = vpop.f32.mrb[0].mxu0
    %v206 = vadd.f32 0.0, %v205
    %v207 = vpop.f32.mrb[0].mxu0
    %v208 = vadd.f32 0.0, %v207
    %v209 = vpop.f32.mrb[0].mxu0
    %v210 = vadd.f32 0.0, %v209
    %v211 = vpop.f32.mrb[0].mxu0
    %v212 = vadd.f32 0.0, %v211
    %213 = vmatprep.mubr.bf16.mxu0 0
    %214 = vmatmul.mubr.bf16.gmra.mrb[0].mxu0 %v59
    %v215 = vpop.f32.mrb[0].mxu0
    %v216 = vadd.f32 0.0, %v215
    %v217 = vpop.f32.mrb[0].mxu0
    %v218 = vadd.f32 0.0, %v217
    %v219 = vpop.f32.mrb[0].mxu0
    %v220 = vadd.f32 0.0, %v219
    %v221 = vpop.f32.mrb[0].mxu0
    %v222 = vadd.f32 0.0, %v221
    %223 = vmatprep.mubr.bf16.mxu0 0
    %224 = vmatmul.mubr.bf16.gmra.mrb[0].mxu0 %v60
    %v225 = vpop.f32.mrb[0].mxu0
    %v226 = vadd.f32 0.0, %v225
    %v227 = vpop.f32.mrb[0].mxu0
    %v228 = vadd.f32 0.0, %v227
    %v229 = vpop.f32.mrb[0].mxu0
    %v230 = vadd.f32 0.0, %v229
    %v231 = vpop.f32.mrb[0].mxu0
    %v232 = vadd.f32 0.0, %v231
    %233 = vmatprep.mubr.bf16.mxu0 0
    %234 = vmatmul.mubr.bf16.gmra.mrb[0].mxu0 %v61
    %v235 = vpop.f32.mrb[0].mxu0
    %v236 = vadd.f32 0.0, %v235
    %v237 = vpop.f32.mrb[0].mxu0
    %v238 = vadd.f32 0.0, %v237
    %v239 = vpop.f32.mrb[0].mxu0
    %v240 = vadd.f32 0.0, %v239
    %v241 = vpop.f32.mrb[0].mxu0
    %v242 = vadd.f32 0.0, %v241
    %243 = vmatprep.mubr.bf16.mxu0 0
    %244 = vmatmul.mubr.bf16.gmra.mrb[0].mxu0 %v62
    %v245 = vpop.f32.mrb[0].mxu0
    %v246 = vadd.f32 0.0, %v245
    %v247 = vpop.f32.mrb[0].mxu0
    %v248 = vadd.f32 0.0, %v247
    %v249 = vpop.f32.mrb[0].mxu0
    %v250 = vadd.f32 0.0, %v249
    %v251 = vpop.f32.mrb[0].mxu0
    %v252 = vadd.f32 0.0, %v251
    %253 = vmatprep.mubr.bf16.mxu0 0
    %254 = vmatmul.mubr.bf16.gmra.mrb[0].mxu0 %v63
    %v255 = vpop.f32.mrb[0].mxu0
    %v256 = vadd.f32 0.0, %v255
    %v257 = vpop.f32.mrb[0].mxu0
    %v258 = vadd.f32 0.0, %v257
    %v259 = vpop.f32.mrb[0].mxu0
    %v260 = vadd.f32 0.0, %v259
    %v261 = vpop.f32.mrb[0].mxu0
    %v262 = vadd.f32 0.0, %v261
    %263 = vmatprep.mubr.bf16.mxu0 0
    %264 = vmatmul.mubr.bf16.gmra.mrb[0].mxu0 %v64
    %v265 = vpop.f32.mrb[0].mxu0
    %v266 = vadd.f32 0.0, %v265
    %v267 = vpop.f32.mrb[0].mxu0
    %v268 = vadd.f32 0.0, %v267
    %v269 = vpop.f32.mrb[0].mxu0
    %v270 = vadd.f32 0.0, %v269
    %v271 = vpop.f32.mrb[0].mxu0
    %v272 = vadd.f32 0.0, %v271
    %273 = vdwg.mxu0
    %v274 = vpack.c.bf16 %v200, %v196
    %v275 = vpack.c.bf16 %v202, %v198
    %v276 = vpack.c.bf16 %v210, %v206
    %v277 = vpack.c.bf16 %v212, %v208
    %v278 = vpack.c.bf16 %v220, %v216
    %v279 = vpack.c.bf16 %v222, %v218
    %v280 = vpack.c.bf16 %v230, %v226
    %v281 = vpack.c.bf16 %v232, %v228
    %v282 = vpack.c.bf16 %v240, %v236
    %v283 = vpack.c.bf16 %v242, %v238
    %v284 = vpack.c.bf16 %v250, %v246
    %v285 = vpack.c.bf16 %v252, %v248
    %v286 = vpack.c.bf16 %v260, %v256
    %v287 = vpack.c.bf16 %v262, %v258
    %v288 = vpack.c.bf16 %v270, %v266
    %v289 = vpack.c.bf16 %v272, %v268
    %v306 = vunpack.c.l.b16 %v274
    %v307 = vunpack.c.l.b16 %v275
    %v308 = vunpack.c.h.b16 %v274
    %v309 = vunpack.c.h.b16 %v275
    %v310 = vunpack.c.l.b16 %v276
    %v311 = vunpack.c.l.b16 %v277
    %v312 = vunpack.c.h.b16 %v276
    %v313 = vunpack.c.h.b16 %v277
    %v314 = vunpack.c.l.b16 %v278
    %v315 = vunpack.c.l.b16 %v279
    %v316 = vunpack.c.h.b16 %v278
    %v317 = vunpack.c.h.b16 %v279
    %v318 = vunpack.c.l.b16 %v280
    %v319 = vunpack.c.l.b16 %v281
    %v320 = vunpack.c.h.b16 %v280
    %v321 = vunpack.c.h.b16 %v281
    %v322 = vunpack.c.l.b16 %v282
    %v323 = vunpack.c.l.b16 %v283
    %v324 = vunpack.c.h.b16 %v282
    %v325 = vunpack.c.h.b16 %v283
    %v326 = vunpack.c.l.b16 %v284
    %v327 = vunpack.c.l.b16 %v285
    %v328 = vunpack.c.h.b16 %v284
    %v329 = vunpack.c.h.b16 %v285
    %v330 = vunpack.c.l.b16 %v286
    %v331 = vunpack.c.l.b16 %v287
    %v332 = vunpack.c.h.b16 %v286
    %v333 = vunpack.c.h.b16 %v287
    %v334 = vunpack.c.l.b16 %v288
    %v335 = vunpack.c.l.b16 %v289
    %v336 = vunpack.c.h.b16 %v288
    %v337 = vunpack.c.h.b16 %v289
    %v338 = vpack.c.b16 %v307, %v306
    %v339 = vpack.c.b16 %v309, %v308
    %v340 = vpack.c.b16 %v311, %v310
    %v341 = vpack.c.b16 %v313, %v312
    %v342 = vpack.c.b16 %v315, %v314
    %v343 = vpack.c.b16 %v317, %v316
    %v344 = vpack.c.b16 %v319, %v318
    %v345 = vpack.c.b16 %v321, %v320
    %v346 = vpack.c.b16 %v323, %v322
    %v347 = vpack.c.b16 %v325, %v324
    %v348 = vpack.c.b16 %v327, %v326
    %v349 = vpack.c.b16 %v329, %v328
    %v350 = vpack.c.b16 %v331, %v330
    %v351 = vpack.c.b16 %v333, %v332
    %v352 = vpack.c.b16 %v335, %v334
    %v353 = vpack.c.b16 %v337, %v336
    %370 = vst [vmem:[#allocation7] sm:$0xff] %v338
    %371 = vst [vmem:[#allocation7 + $0x8] sm:$0xff] %v339
    %372 = vst [vmem:[#allocation7 + $0x10] sm:$0xff] %v340
    %373 = vst [vmem:[#allocation7 + $0x18] sm:$0xff] %v341
    %374 = vst [vmem:[#allocation7 + $0x20] sm:$0xff] %v342
    %375 = vst [vmem:[#allocation7 + $0x28] sm:$0xff] %v343
    %376 = vst [vmem:[#allocation7 + $0x30] sm:$0xff] %v344
    %377 = vst [vmem:[#allocation7 + $0x38] sm:$0xff] %v345
    %378 = vst [vmem:[#allocation7 + $0x40] sm:$0xff] %v346
    %379 = vst [vmem:[#allocation7 + $0x48] sm:$0xff] %v347
    %380 = vst [vmem:[#allocation7 + $0x50] sm:$0xff] %v348
    %381 = vst [vmem:[#allocation7 + $0x58] sm:$0xff] %v349
    %382 = vst [vmem:[#allocation7 + $0x60] sm:$0xff] %v350
    %383 = vst [vmem:[#allocation7 + $0x68] sm:$0xff] %v351
    %384 = vst [vmem:[#allocation7 + $0x70] sm:$0xff] %v352
    %385 = vst [vmem:[#allocation7 + $0x78] sm:$0xff] %v353
    // Predicated region
    $region18: #{tpu_custom_call.1} parent=1 // pred_check
      _
    $region19: #{tpu_custom_call.1} parent=1 // pred_check_branch
      %387 = sbr.rel (0) target = $region21
    $region20: #{tpu_custom_call.1} parent=1 // pred_region
      %s389 = ssub.s32 2048, 2048
      %390 = vsyncadd [#allocation4], %s389
      %s391 = sshll.u32 [#allocation7], 4
      %s392 = int_to_ptr.vmem [resolvable:$true] %s391
      %397 = dma.vmem_to_hbm [thread:$0]  %s392, 2048, %s2, [#allocation4], 128, 128, 8
    $region21: #{tpu_custom_call.1} parent=1 // pred_fallthru
      _
    // Predicated region
    $region22: #{tpu_custom_call.1} parent=1 // pred_check
      _
    $region23: #{tpu_custom_call.1} parent=1 // pred_check_branch
      %399 = sbr.rel (0) target = $region25
    $region24: #{tpu_custom_call.1} parent=1 // pred_region
      %400 = dma.done [#allocation4], 2048
    $region25: #{tpu_custom_call.1} parent=1 // pred_fallthru
      _
    %401 = vsyncpa [#allocation3], 1
    %402 = vsyncpa [#allocation6], 1
    %403 = vsyncpa [#allocation4], 1

</llo_original>
